<compile_context>
chip_gen: v7x
topology: tpu7x:2x2x1
jax: 0.10.0
libtpu: 0.0.40
codegen_flags: <defaults>
</compile_context>

<pallas_src>
import functools
import math

import jax
import jax.numpy as jnp
from jax.experimental import pallas as pl
from jax.experimental.pallas import tpu as pltpu

BN_EPS = 1e-5
LOG_2PI = math.log(2.0 * math.pi)


def _round_up(n, m):
    return ((n + m - 1) // m) * m


def _vmem_limit_bytes():
    # ~3/4 of physical VMEM: ~96 MiB on v5e/v6e (128 MiB), ~48 MiB on v7x (64 MiB).
    try:
        cap = int(pltpu.get_tpu_info().vmem_capacity_bytes)
    except Exception:
        cap = 64 * 1024 * 1024
    cap = max(cap, 32 * 1024 * 1024)
    return min(cap * 3 // 4, 96 * 1024 * 1024)


def _softplus(x):
    # torch.nn.Softplus(beta=1, threshold=20)
    return jnp.where(x > 20.0, x, jnp.log1p(jnp.exp(jnp.minimum(x, 20.0))))


def _gmm_kernel(x_ref, y_ref, w1_ref, w2_ref, wp_ref, vec_ref,
                out_ref, stat_ref, *, n_comp, h1_dim, h2_dim, batch):
    """grid = (pass, batch_tile); see module docstring for the pass structure."""
    f32 = jnp.float32
    K = n_comp
    p = pl.program_id(0)
    i = pl.program_id(1)
    TB = x_ref.shape[0]

    @pl.when(jnp.logical_and(p == 0, i == 0))
    def _():
        stat_ref[...] = jnp.zeros_like(stat_ref)

    vec = vec_ref[...]
    b1, g1, be1 = vec[0:1, :h1_dim], vec[1:2, :h1_dim], vec[2:3, :h1_dim]
    b2, g2, be2 = vec[3:4, :h2_dim], vec[4:5, :h2_dim], vec[5:6, :h2_dim]
    bp = vec[6:7, :]

    # ---- linear1: single dot on the concatenated [dense | embedding] input ----
    h1 = jnp.dot(x_ref[...], w1_ref[...], preferred_element_type=f32) + b1

    def accumulate(h, mean_row, m2_row, width):
        # Chan/Welford combine of tile-centered statistics into the running
        # (mean, M2) rows held in VMEM scratch; rows >= batch are masked out.
        rows = jax.lax.broadcasted_iota(jnp.int32, (TB, 1), 0) + i * TB
        valid = (rows < batch).astype(f32)
        n_b = jnp.minimum(TB, batch - i * TB).astype(f32)   # valid rows this tile
        n_a = (i * TB).astype(f32)                           # valid rows so far
        n_ab = n_a + n_b
        t_mean = jnp.sum(h * valid, axis=0, keepdims=True) / n_b
        centered = (h - t_mean) * valid
        t_m2 = jnp.sum(centered * centered, axis=0, keepdims=True)
        run_mean = stat_ref[mean_row:mean_row + 1, :width]
        run_m2 = stat_ref[m2_row:m2_row + 1, :width]
        delta = t_mean - run_mean
        stat_ref[mean_row:mean_row + 1, :width] = run_mean + delta * (n_b / n_ab)
        stat_ref[m2_row:m2_row + 1, :width] = (
            run_m2 + t_m2 + delta * delta * (n_a * n_b / n_ab))

    def bn_relu(h, mean_row, m2_row, gamma, beta, width):
        mean = stat_ref[mean_row:mean_row + 1, :width]
        var = stat_ref[m2_row:m2_row + 1, :width] * (1.0 / batch)   # biased (train)
        inv = jax.lax.rsqrt(var + BN_EPS)
        return jnp.maximum((h - mean) * inv * gamma + beta, 0.0)

    @pl.when(p == 0)
    def _():
        accumulate(h1, 0, 1, h1_dim)

    @pl.when(p >= 1)
    def _():
        a1 = bn_relu(h1, 0, 1, g1, be1, h1_dim).astype(jnp.bfloat16)
        h2 = jnp.dot(a1, w2_ref[...], preferred_element_type=f32) + b2

        @pl.when(p == 1)
        def _():
            accumulate(h2, 2, 3, h2_dim)

        @pl.when(p == 2)
        def _():
            a2 = bn_relu(h2, 2, 3, g2, be2, h2_dim).astype(jnp.bfloat16)
            # fused, lane-padded head matmul: cols [0,K)=para1, [K,2K)=para2,
            # [2K,3K)=para3 logits, rest zero-padded to 128 lanes.
            head = jnp.dot(a2, wp_ref[...], preferred_element_type=f32) + bp

            col = jax.lax.broadcasted_iota(jnp.int32, head.shape, 1)
            sp = _softplus(head)
            mus = sp[:, :K]
            sigs = sp[:, K:2 * K]

            logit_region = jnp.logical_and(col >= 2 * K, col < 3 * K)
            masked = jnp.where(logit_region, head, -jnp.inf)
            m = jnp.max(masked, axis=1, keepdims=True)
            e = jnp.exp(masked - m)                        # exactly 0 outside region
            denom = jnp.sum(e, axis=1, keepdims=True)
            weights_full = e / denom                       # exact: weights sum to 1
            log_w = head[:, 2 * K:3 * K] - m - jnp.log(denom)

            y = y_ref[...]                                 # (TB, 1)
            inv_sigs = pl.reciprocal(sigs, approx=True)    # divide -> EUP slot
            z = (y - mus) * inv_sigs
            lp = log_w - 0.5 * z * z - jnp.log(sigs) - 0.5 * LOG_2PI
            m2 = jnp.max(lp, axis=1, keepdims=True)
            log_prob = m2 + jnp.log(jnp.sum(jnp.exp(lp - m2), axis=1, keepdims=True))

            # single lane-dense slab: [mus | sigs | weights | log_prob | 0]
            packed = jnp.where(col < 2 * K, sp,
                     jnp.where(logit_region, weights_full,
                     jnp.where(col == 3 * K, log_prob, 0.0)))
            out_ref[...] = packed


def prepare_params(params):
    """One-time packing of module parameters for the kernel (hoisted out of the
    per-call forward): fused lane-padded head weight, bf16 matmul weights, and a
    single (8, OW) slab for all bias/scale/shift vectors."""
    w1 = params["w1"].astype(jnp.float32)
    w2 = params["w2"].astype(jnp.float32)
    H1, H2 = w1.shape[1], w2.shape[1]
    K = params["wp1"].shape[1]
    OW = _round_up(3 * K + 1, 128)
    assert H1 <= OW and H2 <= OW, "hidden widths must fit the packed vector slab"

    wp = jnp.concatenate([params["wp1"], params["wp2"], params["wp3"]], axis=1)
    bp = jnp.concatenate([params["bp1"], params["bp2"], params["bp3"]], axis=1)
    wp_pad = jnp.zeros((H2, OW), jnp.float32).at[:, :3 * K].set(wp.astype(jnp.float32))

    vecs = jnp.zeros((8, OW), jnp.float32)
    vecs = vecs.at[0, :H1].set(params["b1"].reshape(-1).astype(jnp.float32))
    vecs = vecs.at[1, :H1].set(params["g1"].reshape(-1).astype(jnp.float32))
    vecs = vecs.at[2, :H1].set(params["be1"].reshape(-1).astype(jnp.float32))
    vecs = vecs.at[3, :H2].set(params["b2"].reshape(-1).astype(jnp.float32))
    vecs = vecs.at[4, :H2].set(params["be2"].reshape(-1).astype(jnp.float32)) if False else vecs.at[4, :H2].set(params["g2"].reshape(-1).astype(jnp.float32))
    vecs = vecs.at[5, :H2].set(params["be2"].reshape(-1).astype(jnp.float32))
    vecs = vecs.at[6, :3 * K].set(bp.reshape(-1).astype(jnp.float32))

    return dict(
        w1=w1.astype(jnp.bfloat16),
        w2=w2.astype(jnp.bfloat16),
        wp=wp_pad.astype(jnp.bfloat16),
        vecs=vecs,
        emb=params["emb"].astype(jnp.float32),
    )


def gmm_forward(x, packed, *, dim, n_comp, tile_batch=None):
    """GMM module forward. Returns ((mus, sigs, weights), loss)."""
    B, F = x.shape
    assert 0 <= dim < F - 1
    x = x.astype(jnp.float32)

    # glue: target extraction, static-slice column drop, embedding gather (XLA)
    y = x[:, dim:dim + 1]
    x2 = jnp.concatenate([x[:, :dim], x[:, dim + 1:]], axis=1)
    xd = x2[:, :-1]
    loc_ids = x2[:, -1].astype(jnp.int32)
    emb = packed["emb"][loc_ids]
    x_cat = jnp.concatenate([xd, emb], axis=1)          # (B, D_in) linear1 input

    D_in = x_cat.shape[1]
    H1 = packed["w1"].shape[1]
    H2 = packed["w2"].shape[1]
    OW = packed["wp"].shape[1]
    K = n_comp
    assert 3 * K + 1 <= OW

    # batch tiling: 256-row tiles (fills the 256-wide MXU on v6e/v7x); tiles are
    # a multiple of 16 rows for the bf16 sublane packing.
    if tile_batch is None:
        TB = 256 if B > 256 else _round_up(max(B, 16), 16)
    else:
        TB = int(tile_batch)
    assert TB >= 16 and TB % 16 == 0
    n_tiles = (B + TB - 1) // TB
    B_pad = n_tiles * TB
    if B_pad != B:
        pad = B_pad - B
        x_cat = jnp.pad(x_cat, ((0, pad), (0, 0)))
        y_in = jnp.pad(y, ((0, pad), (0, 0)))
    else:
        y_in = y
    x_cat = x_cat.astype(jnp.bfloat16)

    vmem_limit = _vmem_limit_bytes()
    # per-block footprint (double-buffered streams + resident weights + intermediates)
    per_block = (2 * TB * D_in * 2 + 2 * TB * 4 + 2 * TB * OW * 4
                 + (D_in * H1 + H1 * H2 + H2 * OW) * 2 + 2 * 8 * OW * 4
                 + 6 * TB * max(H1, H2, OW) * 4)
    if per_block > vmem_limit:
        raise ValueError(f"tile_batch={TB} too large for scoped VMEM ({per_block} B)")

    kernel = functools.partial(_gmm_kernel, n_comp=K, h1_dim=H1, h2_dim=H2, batch=B)
    out = pl.pallas_call(
        kernel,
        out_shape=jax.ShapeDtypeStruct((B_pad, OW), jnp.float32),
        grid_spec=pltpu.PrefetchScalarGridSpec(
            num_scalar_prefetch=0,
            grid=(3, n_tiles),                            # (pass, batch tile)
            in_specs=[
                pl.BlockSpec((TB, D_in), lambda p, i: (i, 0)),   # x_cat (bf16)
                pl.BlockSpec((TB, 1), lambda p, i: (i, 0)),      # y
                pl.BlockSpec((D_in, H1), lambda p, i: (0, 0)),   # w1 (bf16, resident)
                pl.BlockSpec((H1, H2), lambda p, i: (0, 0)),     # w2 (bf16, resident)
                pl.BlockSpec((H2, OW), lambda p, i: (0, 0)),     # fused head (bf16)
                pl.BlockSpec((8, OW), lambda p, i: (0, 0)),      # bias/scale slab
            ],
            out_specs=pl.BlockSpec((TB, OW), lambda p, i: (i, 0)),
            scratch_shapes=[pltpu.VMEM((8, OW), jnp.float32)],   # BN stat accumulator
        ),
        compiler_params=pltpu.CompilerParams(
            dimension_semantics=("arbitrary", "arbitrary"),
            vmem_limit_bytes=vmem_limit,
        ),
    )(x_cat, y_in, packed["w1"], packed["w2"], packed["wp"], packed["vecs"])

    out = out[:B]
    mus = out[:, :K]
    sigs = out[:, K:2 * K]
    weights = out[:, 2 * K:3 * K]
    log_prob = out[:, 3 * K]
    loss = -jnp.mean(log_prob)
    return (mus, sigs, weights), loss


def reference_forward(x, params, *, dim):
    """Pure-JAX reference (same bf16-input / f32-accumulate matmul math)."""
    x = x.astype(jnp.float32)
    y = x[:, dim:dim + 1]
    x2 = jnp.concatenate([x[:, :dim], x[:, dim + 1:]], axis=1)
    xd = x2[:, :-1]
    loc = x2[:, -1].astype(jnp.int32)
    emb = params["emb"][loc].astype(jnp.float32)
    h = jnp.concatenate([xd, emb], axis=1)

    def mm(a, w):
        return jnp.dot(a.astype(jnp.bfloat16).astype(jnp.float32),
                       w.astype(jnp.bfloat16).astype(jnp.float32))

    def bn_relu(h, g, b):
        mean = jnp.mean(h, axis=0, keepdims=True)
        var = jnp.mean((h - mean) ** 2, axis=0, keepdims=True)
        return jnp.maximum((h - mean) / jnp.sqrt(var + BN_EPS) * g + b, 0.0)

    h = bn_relu(mm(h, params["w1"]) + params["b1"], params["g1"], params["be1"])
    h = bn_relu(mm(h, params["w2"]) + params["b2"], params["g2"], params["be2"])
    mus = _softplus(mm(h, params["wp1"]) + params["bp1"])
    sigs = _softplus(mm(h, params["wp2"]) + params["bp2"])
    logits = mm(h, params["wp3"]) + params["bp3"]
    ml = jnp.max(logits, axis=1, keepdims=True)
    e = jnp.exp(logits - ml)
    w = e / jnp.sum(e, axis=1, keepdims=True)
    lp = (logits - ml - jnp.log(jnp.sum(e, axis=1, keepdims=True))
          - 0.5 * ((y - mus) / sigs) ** 2 - jnp.log(sigs) - 0.5 * LOG_2PI)
    m2 = jnp.max(lp, axis=1, keepdims=True)
    log_prob = m2 + jnp.log(jnp.sum(jnp.exp(lp - m2), axis=1, keepdims=True))
    return (mus, sigs, w), -jnp.mean(log_prob)


def init_params(key, D_in, H1, H2, D_out, loc_embedding):
    ks = jax.random.split(key, 12)

    def lin(kw, kb, fan_in, fan_out):
        bound = 1.0 / math.sqrt(fan_in)
        w = jax.random.uniform(kw, (fan_in, fan_out), jnp.float32, -bound, bound)
        b = jax.random.uniform(kb, (1, fan_out), jnp.float32, -bound, bound)
        return w, b

    w1, b1 = lin(ks[0], ks[1], D_in, H1)
    w2, b2 = lin(ks[2], ks[3], H1, H2)
    wp1, bp1 = lin(ks[4], ks[5], H2, D_out)
    wp2, bp2 = lin(ks[6], ks[7], H2, D_out)
    wp3, bp3 = lin(ks[8], ks[9], H2, D_out)
    emb = jax.random.normal(ks[10], (252, loc_embedding), jnp.float32)
    return dict(
        w1=w1, b1=b1, g1=jnp.ones((1, H1), jnp.float32), be1=jnp.zeros((1, H1), jnp.float32),
        w2=w2, b2=b2, g2=jnp.ones((1, H2), jnp.float32), be2=jnp.zeros((1, H2), jnp.float32),
        wp1=wp1, bp1=bp1, wp2=wp2, bp2=bp2, wp3=wp3, bp3=bp3,
        emb=emb,
    )


if __name__ == "__main__":
    # D_in = 32, H1 = 32, H2 = 32, D_out = 8 mixture comps, loc_embedding = 8
    # raw feature count F = (D_in - loc_embedding) + 2 = 26, dim = 0.
    # B = 24 with a 16-row tile exercises the multi-tile gridded path + masking.
    B, D_in, H1, H2, D_out, loc_emb, dim = 24, 32, 32, 32, 8, 8, 0
    F = (D_in - loc_emb) + 2

    key = jax.random.PRNGKey(0)
    kp, kx, ky, kl = jax.random.split(key, 4)
    params = init_params(kp, D_in, H1, H2, D_out, loc_emb)

    feats = jax.random.normal(kx, (B, F), jnp.float32)
    targets = jax.random.normal(ky, (B,), jnp.float32)
    loc_ids = jax.random.randint(kl, (B,), 0, 252).astype(jnp.float32)
    # column `dim` holds the regression target, the last column the location id.
    x = feats.at[:, dim].set(targets).at[:, -1].set(loc_ids)

    packed = prepare_params(params)   # one-time packing, hoisted out of the forward
    fwd = jax.jit(functools.partial(gmm_forward, dim=dim, n_comp=D_out, tile_batch=16))
    (mus, sigs, weights), loss = fwd(x, packed)
    jax.block_until_ready((mus, sigs, weights, loss))

    assert mus.shape == (B, D_out) and sigs.shape == (B, D_out) and weights.shape == (B, D_out)
    assert bool(jnp.isfinite(loss))
    assert bool(jnp.all(sigs > 0.0)) and bool(jnp.all(mus >= 0.0))
    assert bool(jnp.allclose(jnp.sum(weights, axis=1), 1.0, atol=1e-5))

    # numerical check against a pure-JAX reference with the same precision policy
    (r_mus, r_sigs, r_w), r_loss = jax.jit(
        functools.partial(reference_forward, dim=dim))(x, params)
    jax.block_until_ready(r_loss)
    assert bool(jnp.allclose(mus, r_mus, atol=2e-2, rtol=2e-2))
    assert bool(jnp.allclose(sigs, r_sigs, atol=2e-2, rtol=2e-2))
    assert bool(jnp.allclose(weights, r_w, atol=2e-2, rtol=2e-2))
    assert bool(jnp.abs(loss - r_loss) <= 5e-2 + 5e-2 * jnp.abs(r_loss))
    print("KERNEL_OK")
</pallas_src>

<mosaic_0001>
module attributes {stable_mosaic.version = 11 : i64} {
  func.func @_gmm_kernel(%arg0: i32, %arg1: i32, %arg2: memref<16x32xbf16, #tpu.memory_space<vmem>>, %arg3: memref<16x1xf32, #tpu.memory_space<vmem>>, %arg4: memref<32x32xbf16, #tpu.memory_space<vmem>>, %arg5: memref<32x32xbf16, #tpu.memory_space<vmem>>, %arg6: memref<32x128xbf16, #tpu.memory_space<vmem>>, %arg7: memref<8x128xf32, #tpu.memory_space<vmem>>, %arg8: memref<16x128xf32, #tpu.memory_space<vmem>>, %arg9: memref<8x128xf32, #tpu.memory_space<vmem>>) attributes {dimension_semantics = [#tpu.dimension_semantics<arbitrary>, #tpu.dimension_semantics<arbitrary>], iteration_bounds = array<i64: 3, 2>, scalar_prefetch = 0 : i64, scratch_operands = 1 : i64, tpu.core_type = #tpu.core_type<tc>, window_params = [{transform_indices = @transform_0, window_bounds = array<i64: 16, 32>}, {transform_indices = @transform_1, window_bounds = array<i64: 16, 1>}, {pipeline_mode = #tpu.pipeline_mode<synchronous>, transform_indices = @transform_2, window_bounds = array<i64: 32, 32>}, {pipeline_mode = #tpu.pipeline_mode<synchronous>, transform_indices = @transform_3, window_bounds = array<i64: 32, 32>}, {pipeline_mode = #tpu.pipeline_mode<synchronous>, transform_indices = @transform_4, window_bounds = array<i64: 32, 128>}, {pipeline_mode = #tpu.pipeline_mode<synchronous>, transform_indices = @transform_5, window_bounds = array<i64: 8, 128>}, {transform_indices = @transform_6, window_bounds = array<i64: 16, 128>}]} {
    %c0_i32 = arith.constant 0 : i32
    %0 = arith.cmpi eq, %arg0, %c0_i32 : i32
    %c0_i32_0 = arith.constant 0 : i32
    %1 = arith.cmpi eq, %arg1, %c0_i32_0 : i32
    %2 = arith.andi %0, %1 : i1
    %3 = arith.extui %2 : i1 to i32
    %c0_i32_1 = arith.constant 0 : i32
    %4 = arith.cmpi ne, %3, %c0_i32_1 : i32
    scf.if %4 {
      %cst_10 = arith.constant 0.000000e+00 : f32
      %24 = vector.broadcast %cst_10 : f32 to vector<8x128xf32>
      %c0_11 = arith.constant 0 : index
      %c0_12 = arith.constant 0 : index
      %25 = vector.load %arg9[%c0_11, %c0_12] : memref<8x128xf32, #tpu.memory_space<vmem>>, vector<8x128xf32>
      tpu.vector_store %arg9[%c0_11, %c0_12], %24 {strides = array<i32>} : memref<8x128xf32, #tpu.memory_space<vmem>>, vector<8x128xf32>,
    } else {
    }
    %c0 = arith.constant 0 : index
    %c0_2 = arith.constant 0 : index
    %5 = vector.load %arg7[%c0, %c0_2] : memref<8x128xf32, #tpu.memory_space<vmem>>, vector<8x128xf32>
    %6 = vector.extract_strided_slice %5 {offsets = [0, 0], sizes = [1, 32], strides = [1, 1]} : vector<8x128xf32> to vector<1x32xf32>
    %7 = vector.extract_strided_slice %5 {offsets = [1, 0], sizes = [1, 32], strides = [1, 1]} : vector<8x128xf32> to vector<1x32xf32>
    %8 = vector.extract_strided_slice %5 {offsets = [2, 0], sizes = [1, 32], strides = [1, 1]} : vector<8x128xf32> to vector<1x32xf32>
    %9 = vector.extract_strided_slice %5 {offsets = [3, 0], sizes = [1, 32], strides = [1, 1]} : vector<8x128xf32> to vector<1x32xf32>
    %10 = vector.extract_strided_slice %5 {offsets = [4, 0], sizes = [1, 32], strides = [1, 1]} : vector<8x128xf32> to vector<1x32xf32>
    %11 = vector.extract_strided_slice %5 {offsets = [5, 0], sizes = [1, 32], strides = [1, 1]} : vector<8x128xf32> to vector<1x32xf32>
    %12 = vector.extract_strided_slice %5 {offsets = [6, 0], sizes = [1, 128], strides = [1, 1]} : vector<8x128xf32> to vector<1x128xf32>
    %c0_3 = arith.constant 0 : index
    %c0_4 = arith.constant 0 : index
    %13 = vector.load %arg2[%c0_3, %c0_4] : memref<16x32xbf16, #tpu.memory_space<vmem>>, vector<16x32xbf16>
    %c0_5 = arith.constant 0 : index
    %c0_6 = arith.constant 0 : index
    %14 = vector.load %arg4[%c0_5, %c0_6] : memref<32x32xbf16, #tpu.memory_space<vmem>>, vector<32x32xbf16>
    %cst = arith.constant dense<0.000000e+00> : vector<16x32xf32>
    %15 = tpu.matmul %13, %14, %cst {dimension_numbers = #tpu.dot_dimension_numbers<[1], [0], [0], [1], [0, 0, 1, 1], [], []>} : vector<16x32xbf16>, vector<32x32xbf16>, vector<16x32xf32> -> vector<16x32xf32>
    %16 = vector.broadcast %6 : vector<1x32xf32> to vector<16x32xf32>
    %17 = arith.addf %15, %16 : vector<16x32xf32>
    %c0_i32_7 = arith.constant 0 : i32
    %18 = arith.cmpi eq, %arg0, %c0_i32_7 : i32
    %19 = arith.extui %18 : i1 to i32
    %c0_i32_8 = arith.constant 0 : i32
    %20 = arith.cmpi ne, %19, %c0_i32_8 : i32
    scf.if %20 {
      %24 = tpu.iota {dimensions = array<i32: 0>} : vector<16x1xi32>
      %c16_i32 = arith.constant 16 : i32
      %25 = arith.muli %arg1, %c16_i32 : i32
      %26 = vector.broadcast %25 : i32 to vector<16x1xi32>
      %27 = arith.addi %24, %26 : vector<16x1xi32>
      %c24_i32 = arith.constant 24 : i32
      %28 = vector.broadcast %c24_i32 : i32 to vector<16x1xi32>
      %29 = arith.cmpi slt, %27, %28 : vector<16x1xi32>
      %30 = arith.extui %29 : vector<16x1xi1> to vector<16x1xi32>
      %31 = arith.sitofp %30 : vector<16x1xi32> to vector<16x1xf32>
      %c16_i32_10 = arith.constant 16 : i32
      %32 = arith.muli %arg1, %c16_i32_10 : i32
      %c24_i32_11 = arith.constant 24 : i32
      %33 = arith.subi %c24_i32_11, %32 : i32
      %c16_i32_12 = arith.constant 16 : i32
      %34 = arith.minsi %c16_i32_12, %33 : i32
      %35 = arith.sitofp %34 : i32 to f32
      %c16_i32_13 = arith.constant 16 : i32
      %36 = arith.muli %arg1, %c16_i32_13 : i32
      %37 = arith.sitofp %36 : i32 to f32
      %38 = arith.addf %37, %35 : f32
      %39 = vector.broadcast %31 : vector<16x1xf32> to vector<16x32xf32>
      %40 = arith.mulf %17, %39 : vector<16x32xf32>
      %cst_14 = arith.constant dense<0.000000e+00> : vector<32xf32>
      %41 = vector.multi_reduction <add>, %40, %cst_14 [0] : vector<16x32xf32> to vector<32xf32>
      %42 = vector.shape_cast %41 : vector<32xf32> to vector<1x32xf32>
      %43 = vector.broadcast %35 : f32 to vector<1x32xf32>
      %44 = arith.divf %42, %43 : vector<1x32xf32>
      %45 = vector.broadcast %44 : vector<1x32xf32> to vector<16x32xf32>
      %46 = arith.subf %17, %45 : vector<16x32xf32>
      %47 = vector.broadcast %31 : vector<16x1xf32> to vector<16x32xf32>
      %48 = arith.mulf %46, %47 : vector<16x32xf32>
      %49 = arith.mulf %48, %48 : vector<16x32xf32>
      %cst_15 = arith.constant dense<0.000000e+00> : vector<32xf32>
      %50 = vector.multi_reduction <add>, %49, %cst_15 [0] : vector<16x32xf32> to vector<32xf32>
      %51 = vector.shape_cast %50 : vector<32xf32> to vector<1x32xf32>
      %c0_16 = arith.constant 0 : index
      %c0_17 = arith.constant 0 : index
      %52 = vector.load %arg9[%c0_16, %c0_17] : memref<8x128xf32, #tpu.memory_space<vmem>>, vector<1x32xf32>
      %c1 = arith.constant 1 : index
      %c0_18 = arith.constant 0 : index
      %53 = vector.load %arg9[%c1, %c0_18] : memref<8x128xf32, #tpu.memory_space<vmem>>, vector<1x32xf32>
      %54 = arith.subf %44, %52 : vector<1x32xf32>
      %55 = arith.divf %35, %38 : f32
      %56 = vector.broadcast %55 : f32 to vector<1x32xf32>
      %57 = arith.mulf %54, %56 : vector<1x32xf32>
      %58 = arith.addf %52, %57 : vector<1x32xf32>
      %c0_19 = arith.constant 0 : index
      %c0_20 = arith.constant 0 : index
      %59 = vector.load %arg9[%c0_19, %c0_20] : memref<8x128xf32, #tpu.memory_space<vmem>>, vector<1x32xf32>
      tpu.vector_store %arg9[%c0_19, %c0_20], %58 {strides = array<i32>} : memref<8x128xf32, #tpu.memory_space<vmem>>, vector<1x32xf32>,
      %60 = arith.addf %53, %51 : vector<1x32xf32>
      %61 = arith.mulf %54, %54 : vector<1x32xf32>
      %62 = arith.mulf %37, %35 : f32
      %63 = arith.divf %62, %38 : f32
      %64 = vector.broadcast %63 : f32 to vector<1x32xf32>
      %65 = arith.mulf %61, %64 : vector<1x32xf32>
      %66 = arith.addf %60, %65 : vector<1x32xf32>
      %c1_21 = arith.constant 1 : index
      %c0_22 = arith.constant 0 : index
      %67 = vector.load %arg9[%c1_21, %c0_22] : memref<8x128xf32, #tpu.memory_space<vmem>>, vector<1x32xf32>
      tpu.vector_store %arg9[%c1_21, %c0_22], %66 {strides = array<i32>} : memref<8x128xf32, #tpu.memory_space<vmem>>, vector<1x32xf32>,
    } else {
    }
    %c1_i32 = arith.constant 1 : i32
    %21 = arith.cmpi sge, %arg0, %c1_i32 : i32
    %22 = arith.extui %21 : i1 to i32
    %c0_i32_9 = arith.constant 0 : i32
    %23 = arith.cmpi ne, %22, %c0_i32_9 : i32
    scf.if %23 {
      %c0_10 = arith.constant 0 : index
      %c0_11 = arith.constant 0 : index
      %24 = vector.load %arg9[%c0_10, %c0_11] : memref<8x128xf32, #tpu.memory_space<vmem>>, vector<1x32xf32>
      %c1 = arith.constant 1 : index
      %c0_12 = arith.constant 0 : index
      %25 = vector.load %arg9[%c1, %c0_12] : memref<8x128xf32, #tpu.memory_space<vmem>>, vector<1x32xf32>
      %cst_13 = arith.constant 0.0416666679 : f32
      %26 = vector.broadcast %cst_13 : f32 to vector<1x32xf32>
      %27 = arith.mulf %25, %26 : vector<1x32xf32>
      %cst_14 = arith.constant 9.99999974E-6 : f32
      %28 = vector.broadcast %cst_14 : f32 to vector<1x32xf32>
      %29 = arith.addf %27, %28 : vector<1x32xf32>
      %30 = math.rsqrt %29 : vector<1x32xf32>
      %31 = vector.broadcast %24 : vector<1x32xf32> to vector<16x32xf32>
      %32 = arith.subf %17, %31 : vector<16x32xf32>
      %33 = vector.broadcast %30 : vector<1x32xf32> to vector<16x32xf32>
      %34 = arith.mulf %32, %33 : vector<16x32xf32>
      %35 = vector.broadcast %7 : vector<1x32xf32> to vector<16x32xf32>
      %36 = arith.mulf %34, %35 : vector<16x32xf32>
      %37 = vector.broadcast %8 : vector<1x32xf32> to vector<16x32xf32>
      %38 = arith.addf %36, %37 : vector<16x32xf32>
      %cst_15 = arith.constant 0.000000e+00 : f32
      %39 = vector.broadcast %cst_15 : f32 to vector<16x32xf32>
      %40 = arith.maximumf %38, %39 : vector<16x32xf32>
      %41 = arith.truncf %40 : vector<16x32xf32> to vector<16x32xbf16>
      %c0_16 = arith.constant 0 : index
      %c0_17 = arith.constant 0 : index
      %42 = vector.load %arg5[%c0_16, %c0_17] : memref<32x32xbf16, #tpu.memory_space<vmem>>, vector<32x32xbf16>
      %cst_18 = arith.constant dense<0.000000e+00> : vector<16x32xf32>
      %43 = tpu.matmul %41, %42, %cst_18 {dimension_numbers = #tpu.dot_dimension_numbers<[1], [0], [0], [1], [0, 0, 1, 1], [], []>} : vector<16x32xbf16>, vector<32x32xbf16>, vector<16x32xf32> -> vector<16x32xf32>
      %44 = vector.broadcast %9 : vector<1x32xf32> to vector<16x32xf32>
      %45 = arith.addf %43, %44 : vector<16x32xf32>
      %c1_i32_19 = arith.constant 1 : i32
      %46 = arith.cmpi eq, %arg0, %c1_i32_19 : i32
      %47 = arith.extui %46 : i1 to i32
      %c0_i32_20 = arith.constant 0 : i32
      %48 = arith.cmpi ne, %47, %c0_i32_20 : i32
      scf.if %48 {
        %52 = tpu.iota {dimensions = array<i32: 0>} : vector<16x1xi32>
        %c16_i32 = arith.constant 16 : i32
        %53 = arith.muli %arg1, %c16_i32 : i32
        %54 = vector.broadcast %53 : i32 to vector<16x1xi32>
        %55 = arith.addi %52, %54 : vector<16x1xi32>
        %c24_i32 = arith.constant 24 : i32
        %56 = vector.broadcast %c24_i32 : i32 to vector<16x1xi32>
        %57 = arith.cmpi slt, %55, %56 : vector<16x1xi32>
        %58 = arith.extui %57 : vector<16x1xi1> to vector<16x1xi32>
        %59 = arith.sitofp %58 : vector<16x1xi32> to vector<16x1xf32>
        %c16_i32_22 = arith.constant 16 : i32
        %60 = arith.muli %arg1, %c16_i32_22 : i32
        %c24_i32_23 = arith.constant 24 : i32
        %61 = arith.subi %c24_i32_23, %60 : i32
        %c16_i32_24 = arith.constant 16 : i32
        %62 = arith.minsi %c16_i32_24, %61 : i32
        %63 = arith.sitofp %62 : i32 to f32
        %c16_i32_25 = arith.constant 16 : i32
        %64 = arith.muli %arg1, %c16_i32_25 : i32
        %65 = arith.sitofp %64 : i32 to f32
        %66 = arith.addf %65, %63 : f32
        %67 = vector.broadcast %59 : vector<16x1xf32> to vector<16x32xf32>
        %68 = arith.mulf %45, %67 : vector<16x32xf32>
        %cst_26 = arith.constant dense<0.000000e+00> : vector<32xf32>
        %69 = vector.multi_reduction <add>, %68, %cst_26 [0] : vector<16x32xf32> to vector<32xf32>
        %70 = vector.shape_cast %69 : vector<32xf32> to vector<1x32xf32>
        %71 = vector.broadcast %63 : f32 to vector<1x32xf32>
        %72 = arith.divf %70, %71 : vector<1x32xf32>
        %73 = vector.broadcast %72 : vector<1x32xf32> to vector<16x32xf32>
        %74 = arith.subf %45, %73 : vector<16x32xf32>
        %75 = vector.broadcast %59 : vector<16x1xf32> to vector<16x32xf32>
        %76 = arith.mulf %74, %75 : vector<16x32xf32>
        %77 = arith.mulf %76, %76 : vector<16x32xf32>
        %cst_27 = arith.constant dense<0.000000e+00> : vector<32xf32>
        %78 = vector.multi_reduction <add>, %77, %cst_27 [0] : vector<16x32xf32> to vector<32xf32>
        %79 = vector.shape_cast %78 : vector<32xf32> to vector<1x32xf32>
        %c2 = arith.constant 2 : index
        %c0_28 = arith.constant 0 : index
        %80 = vector.load %arg9[%c2, %c0_28] : memref<8x128xf32, #tpu.memory_space<vmem>>, vector<1x32xf32>
        %c3 = arith.constant 3 : index
        %c0_29 = arith.constant 0 : index
        %81 = vector.load %arg9[%c3, %c0_29] : memref<8x128xf32, #tpu.memory_space<vmem>>, vector<1x32xf32>
        %82 = arith.subf %72, %80 : vector<1x32xf32>
        %83 = arith.divf %63, %66 : f32
        %84 = vector.broadcast %83 : f32 to vector<1x32xf32>
        %85 = arith.mulf %82, %84 : vector<1x32xf32>
        %86 = arith.addf %80, %85 : vector<1x32xf32>
        %c2_30 = arith.constant 2 : index
        %c0_31 = arith.constant 0 : index
        %87 = vector.load %arg9[%c2_30, %c0_31] : memref<8x128xf32, #tpu.memory_space<vmem>>, vector<1x32xf32>
        tpu.vector_store %arg9[%c2_30, %c0_31], %86 {strides = array<i32>} : memref<8x128xf32, #tpu.memory_space<vmem>>, vector<1x32xf32>,
        %88 = arith.addf %81, %79 : vector<1x32xf32>
        %89 = arith.mulf %82, %82 : vector<1x32xf32>
        %90 = arith.mulf %65, %63 : f32
        %91 = arith.divf %90, %66 : f32
        %92 = vector.broadcast %91 : f32 to vector<1x32xf32>
        %93 = arith.mulf %89, %92 : vector<1x32xf32>
        %94 = arith.addf %88, %93 : vector<1x32xf32>
        %c3_32 = arith.constant 3 : index
        %c0_33 = arith.constant 0 : index
        %95 = vector.load %arg9[%c3_32, %c0_33] : memref<8x128xf32, #tpu.memory_space<vmem>>, vector<1x32xf32>
        tpu.vector_store %arg9[%c3_32, %c0_33], %94 {strides = array<i32>} : memref<8x128xf32, #tpu.memory_space<vmem>>, vector<1x32xf32>,
      } else {
      }
      %c2_i32 = arith.constant 2 : i32
      %49 = arith.cmpi eq, %arg0, %c2_i32 : i32
      %50 = arith.extui %49 : i1 to i32
      %c0_i32_21 = arith.constant 0 : i32
      %51 = arith.cmpi ne, %50, %c0_i32_21 : i32
      scf.if %51 {
        %c2 = arith.constant 2 : index
        %c0_22 = arith.constant 0 : index
        %52 = vector.load %arg9[%c2, %c0_22] : memref<8x128xf32, #tpu.memory_space<vmem>>, vector<1x32xf32>
        %c3 = arith.constant 3 : index
        %c0_23 = arith.constant 0 : index
        %53 = vector.load %arg9[%c3, %c0_23] : memref<8x128xf32, #tpu.memory_space<vmem>>, vector<1x32xf32>
        %cst_24 = arith.constant 0.0416666679 : f32
        %54 = vector.broadcast %cst_24 : f32 to vector<1x32xf32>
        %55 = arith.mulf %53, %54 : vector<1x32xf32>
        %cst_25 = arith.constant 9.99999974E-6 : f32
        %56 = vector.broadcast %cst_25 : f32 to vector<1x32xf32>
        %57 = arith.addf %55, %56 : vector<1x32xf32>
        %58 = math.rsqrt %57 : vector<1x32xf32>
        %59 = vector.broadcast %52 : vector<1x32xf32> to vector<16x32xf32>
        %60 = arith.subf %45, %59 : vector<16x32xf32>
        %61 = vector.broadcast %58 : vector<1x32xf32> to vector<16x32xf32>
        %62 = arith.mulf %60, %61 : vector<16x32xf32>
        %63 = vector.broadcast %10 : vector<1x32xf32> to vector<16x32xf32>
        %64 = arith.mulf %62, %63 : vector<16x32xf32>
        %65 = vector.broadcast %11 : vector<1x32xf32> to vector<16x32xf32>
        %66 = arith.addf %64, %65 : vector<16x32xf32>
        %cst_26 = arith.constant 0.000000e+00 : f32
        %67 = vector.broadcast %cst_26 : f32 to vector<16x32xf32>
        %68 = arith.maximumf %66, %67 : vector<16x32xf32>
        %69 = arith.truncf %68 : vector<16x32xf32> to vector<16x32xbf16>
        %c0_27 = arith.constant 0 : index
        %c0_28 = arith.constant 0 : index
        %70 = vector.load %arg6[%c0_27, %c0_28] : memref<32x128xbf16, #tpu.memory_space<vmem>>, vector<32x128xbf16>
        %cst_29 = arith.constant dense<0.000000e+00> : vector<16x128xf32>
        %71 = tpu.matmul %69, %70, %cst_29 {dimension_numbers = #tpu.dot_dimension_numbers<[1], [0], [0], [1], [0, 0, 1, 1], [], []>} : vector<16x32xbf16>, vector<32x128xbf16>, vector<16x128xf32> -> vector<16x128xf32>
        %72 = vector.broadcast %12 : vector<1x128xf32> to vector<16x128xf32>
        %73 = arith.addf %71, %72 : vector<16x128xf32>
        %74 = tpu.iota {dimensions = array<i32: 1>} : vector<16x128xi32>
        %cst_30 = arith.constant 2.000000e+01 : f32
        %75 = vector.broadcast %cst_30 : f32 to vector<16x128xf32>
        %76 = arith.cmpf ogt, %73, %75 : vector<16x128xf32>
        %cst_31 = arith.constant 2.000000e+01 : f32
        %77 = vector.broadcast %cst_31 : f32 to vector<16x128xf32>
        %78 = arith.minimumf %73, %77 : vector<16x128xf32>
        %79 = math.exp %78 : vector<16x128xf32>
        %80 = math.log1p %79 : vector<16x128xf32>
        %81 = arith.select %76, %73, %80 : vector<16x128xi1>, vector<16x128xf32>
        %82 = vector.extract_strided_slice %81 {offsets = [0, 0], sizes = [16, 8], strides = [1, 1]} : vector<16x128xf32> to vector<16x8xf32>
        %83 = vector.extract_strided_slice %81 {offsets = [0, 8], sizes = [16, 8], strides = [1, 1]} : vector<16x128xf32> to vector<16x8xf32>
        %c16_i32 = arith.constant 16 : i32
        %84 = vector.broadcast %c16_i32 : i32 to vector<16x128xi32>
        %85 = arith.cmpi sge, %74, %84 : vector<16x128xi32>
        %c24_i32 = arith.constant 24 : i32
        %86 = vector.broadcast %c24_i32 : i32 to vector<16x128xi32>
        %87 = arith.cmpi slt, %74, %86 : vector<16x128xi32>
        %88 = arith.andi %85, %87 : vector<16x128xi1>
        %cst_32 = arith.constant 0xFF800000 : f32
        %89 = vector.broadcast %cst_32 : f32 to vector<16x128xf32>
        %90 = arith.select %88, %73, %89 : vector<16x128xi1>, vector<16x128xf32>
        %cst_33 = arith.constant dense<0xFF800000> : vector<16xf32>
        %91 = vector.multi_reduction <maximumf>, %90, %cst_33 [1] : vector<16x128xf32> to vector<16xf32>
        %92 = vector.shape_cast %91 : vector<16xf32> to vector<16x1xf32>
        %93 = vector.broadcast %92 : vector<16x1xf32> to vector<16x128xf32>
        %94 = arith.subf %90, %93 : vector<16x128xf32>
        %95 = math.exp %94 : vector<16x128xf32>
        %cst_34 = arith.constant dense<0.000000e+00> : vector<16xf32>
        %96 = vector.multi_reduction <add>, %95, %cst_34 [1] : vector<16x128xf32> to vector<16xf32>
        %97 = vector.shape_cast %96 : vector<16xf32> to vector<16x1xf32>
        %98 = vector.broadcast %97 : vector<16x1xf32> to vector<16x128xf32>
        %99 = arith.divf %95, %98 : vector<16x128xf32>
        %100 = vector.extract_strided_slice %73 {offsets = [0, 16], sizes = [16, 8], strides = [1, 1]} : vector<16x128xf32> to vector<16x8xf32>
        %101 = vector.broadcast %92 : vector<16x1xf32> to vector<16x8xf32>
        %102 = arith.subf %100, %101 : vector<16x8xf32>
        %103 = math.log %97 : vector<16x1xf32>
        %104 = vector.broadcast %103 : vector<16x1xf32> to vector<16x8xf32>
        %105 = arith.subf %102, %104 : vector<16x8xf32>
        %c0_35 = arith.constant 0 : index
        %c0_36 = arith.constant 0 : index
        %106 = vector.load %arg3[%c0_35, %c0_36] : memref<16x1xf32, #tpu.memory_space<vmem>>, vector<16x1xf32>
        %107 = tpu.reciprocal %83 {approx = true} : vector<16x8xf32> -> vector<16x8xf32>
        %108 = vector.broadcast %106 : vector<16x1xf32> to vector<16x8xf32>
        %109 = arith.subf %108, %82 : vector<16x8xf32>
        %110 = arith.mulf %109, %107 : vector<16x8xf32>
        %cst_37 = arith.constant 5.000000e-01 : f32
        %111 = vector.broadcast %cst_37 : f32 to vector<16x8xf32>
        %112 = arith.mulf %111, %110 : vector<16x8xf32>
        %113 = arith.mulf %112, %110 : vector<16x8xf32>
        %114 = arith.subf %105, %113 : vector<16x8xf32>
        %115 = math.log %83 : vector<16x8xf32>
        %116 = arith.subf %114, %115 : vector<16x8xf32>
        %cst_38 = arith.constant 0.918938517 : f32
        %117 = vector.broadcast %cst_38 : f32 to vector<16x8xf32>
        %118 = arith.subf %116, %117 : vector<16x8xf32>
        %cst_39 = arith.constant dense<0xFF800000> : vector<16xf32>
        %119 = vector.multi_reduction <maximumf>, %118, %cst_39 [1] : vector<16x8xf32> to vector<16xf32>
        %120 = vector.shape_cast %119 : vector<16xf32> to vector<16x1xf32>
        %121 = vector.broadcast %120 : vector<16x1xf32> to vector<16x8xf32>
        %122 = arith.subf %118, %121 : vector<16x8xf32>
        %123 = math.exp %122 : vector<16x8xf32>
        %cst_40 = arith.constant dense<0.000000e+00> : vector<16xf32>
        %124 = vector.multi_reduction <add>, %123, %cst_40 [1] : vector<16x8xf32> to vector<16xf32>
        %125 = vector.shape_cast %124 : vector<16xf32> to vector<16x1xf32>
        %126 = math.log %125 : vector<16x1xf32>
        %127 = arith.addf %120, %126 : vector<16x1xf32>
        %c16_i32_41 = arith.constant 16 : i32
        %128 = vector.broadcast %c16_i32_41 : i32 to vector<16x128xi32>
        %129 = arith.cmpi slt, %74, %128 : vector<16x128xi32>
        %c24_i32_42 = arith.constant 24 : i32
        %130 = vector.broadcast %c24_i32_42 : i32 to vector<16x128xi32>
        %131 = arith.cmpi eq, %74, %130 : vector<16x128xi32>
        %cst_43 = arith.constant 0.000000e+00 : f32
        %132 = vector.shape_cast %127 : vector<16x1xf32> to vector<16x1xf32>
        %133 = vector.broadcast %132 : vector<16x1xf32> to vector<16x128xf32>
        %134 = vector.broadcast %cst_43 : f32 to vector<16x128xf32>
        %135 = arith.select %131, %133, %134 : vector<16x128xi1>, vector<16x128xf32>
        %136 = arith.select %88, %99, %135 : vector<16x128xi1>, vector<16x128xf32>
        %137 = arith.select %129, %81, %136 : vector<16x128xi1>, vector<16x128xf32>
        %c0_44 = arith.constant 0 : index
        %c0_45 = arith.constant 0 : index
        %138 = vector.load %arg8[%c0_44, %c0_45] : memref<16x128xf32, #tpu.memory_space<vmem>>, vector<16x128xf32>
        tpu.vector_store %arg8[%c0_44, %c0_45], %137 {strides = array<i32>} : memref<16x128xf32, #tpu.memory_space<vmem>>, vector<16x128xf32>,
      } else {
      }
    } else {
    }
    return
  }
  func.func @transform_0(%arg0: i32, %arg1: i32) -> (i32, i32) {
    %c0_i32 = arith.constant 0 : i32
    %c0_i32_0 = arith.constant 0 : i32
    return %arg1, %c0_i32 : i32, i32
  }
  func.func @transform_1(%arg0: i32, %arg1: i32) -> (i32, i32) {
    %c0_i32 = arith.constant 0 : i32
    %c0_i32_0 = arith.constant 0 : i32
    return %arg1, %c0_i32 : i32, i32
  }
  func.func @transform_2(%arg0: i32, %arg1: i32) -> (i32, i32) {
    %c0_i32 = arith.constant 0 : i32
    %c0_i32_0 = arith.constant 0 : i32
    %c0_i32_1 = arith.constant 0 : i32
    return %c0_i32, %c0_i32_0 : i32, i32
  }
  func.func @transform_3(%arg0: i32, %arg1: i32) -> (i32, i32) {
    %c0_i32 = arith.constant 0 : i32
    %c0_i32_0 = arith.constant 0 : i32
    %c0_i32_1 = arith.constant 0 : i32
    return %c0_i32, %c0_i32_0 : i32, i32
  }
  func.func @transform_4(%arg0: i32, %arg1: i32) -> (i32, i32) {
    %c0_i32 = arith.constant 0 : i32
    %c0_i32_0 = arith.constant 0 : i32
    %c0_i32_1 = arith.constant 0 : i32
    return %c0_i32, %c0_i32_0 : i32, i32
  }
  func.func @transform_5(%arg0: i32, %arg1: i32) -> (i32, i32) {
    %c0_i32 = arith.constant 0 : i32
    %c0_i32_0 = arith.constant 0 : i32
    %c0_i32_1 = arith.constant 0 : i32
    return %c0_i32, %c0_i32_0 : i32, i32
  }
  func.func @transform_6(%arg0: i32, %arg1: i32) -> (i32, i32) {
    %c0_i32 = arith.constant 0 : i32
    %c0_i32_0 = arith.constant 0 : i32
    return %arg1, %c0_i32 : i32, i32
  }
}

</mosaic_0001>

<llo_original>
// kernel: gmm_forward.1
$region0: #{gmm_forward.1}
  #allocation0 [shape = 'u32[]', space=smem, size = 0x4, offset = 0x4, fixed_abs, tag = 'smem constant byte address 0x4 - core index']
  #allocation1 [shape = 'u32[144,128]{1,0:T(1,128)}', space=vmem, size = 0x12000, scoped, tag = 'internal scratch']
  #allocation2 [shape = 'f32[8,128]{1,0:T(8,128)}', space=vmem, size = 0x1000, scoped, tag = 'scratch operand']
  %s0 = inlined_call_operand.vmem [shape: bf16[32,32], index: 0, kind: input, shape index: {}]
  %s1 = inlined_call_operand.vmem [shape: f32[32,1], index: 1, kind: input, shape index: {}]
  %s2 = inlined_call_operand.vmem [shape: bf16[32,32], index: 2, kind: input, shape index: {}]
  %s3 = inlined_call_operand.vmem [shape: bf16[32,32], index: 3, kind: input, shape index: {}]
  %s4 = inlined_call_operand.vmem [shape: bf16[32,128], index: 4, kind: input, shape index: {}]
  %s5 = inlined_call_operand.vmem [shape: f32[8,128], index: 5, kind: input, shape index: {}]
  %s6 = inlined_call_operand.vmem [shape: f32[32,128], index: 6, kind: output, shape index: {}]
  %s7 = sld [smem:[#allocation0]]
  $region77: #{gmm_forward.1} parent=0
    _
  %s9 = ssub.s32 1, %s7
  %s10 = scalar_select 0, %s9, %s7
  loop: start=0, step=1, limit=8
  $region2: #{gmm_forward.1} parent=0 // loop_pre_header
    _
  $region3: #{gmm_forward.1} parent=0 // loop_header
    %s12 = sphi 0, %s16
    %p13 = scmp.ge.s32.totalorder %s12, 8
    %s19 = sphi 0, %s31
    %s20 = sphi 0, %s27
    %s21 = sphi 0, %s19
    %s22 = sphi 0, %s20
    %s23 = sphi 0, %s21
    %s24 = sphi 0, %s22
    %s34 = sphi 0, %s36
    %s37 = sphi 0, %s34
    %s38 = sphi 0, %s37
    %s54 = sphi 0, %s38
    %s60 = sphi 0, %s62
    %s63 = sphi 0, %s60
    %s64 = sphi 0, %s63
    %s80 = sphi 0, %s64
    %s84 = sphi 0, %s84
    %s86 = sphi 0, %s84
    %s87 = sphi 0, %s86
    %s101 = sphi 0, %s87
    %s105 = sphi 0, %s105
    %s107 = sphi 0, %s105
    %s108 = sphi 0, %s107
    %s122 = sphi 0, %s108
    %s126 = sphi 0, %s126
    %s128 = sphi 0, %s126
    %s129 = sphi 0, %s128
    %s143 = sphi 0, %s129
    %s147 = sphi 0, %s147
    %s149 = sphi 0, %s147
    %s150 = sphi 0, %s149
    %s164 = sphi 0, %s150
    %s170 = sphi 0, %s172
    %s173 = sphi 0, %s170
    %s174 = sphi 0, %s173
    %s190 = sphi 0, %s174
  $region4: #{gmm_forward.1} parent=0 // loop_header_branch
    %15 = sbr.rel (%p13) target = $region8
  $region5: #{gmm_forward.1} parent=0 // loop_body
    %s17 = ssub.s32 %s12, 1
    %s18 = ssub.s32 %s12, 2
    %s25 = sadd.s32 1, %s20
    %p26 = scmp.ge.s32.totalorder %s25, 2
    %s27 = scalar_select %p26, 0, %s25
    %s28 = sadd.s32 1, %s19
    %s29 = scalar_select %p26, %s28, %s19
    %p30 = scmp.ge.s32.totalorder %s29, 3
    %s31 = scalar_select %p30, 0, %s29
    %s32 = ssub.s32 %s20, %s27
    %p33 = scmp.eq.s32.totalorder %s32, 0
    %s35 = sadd.s32 %s34, 1
    %s36 = scalar_select %p33, %s34, %s35
    %p39 = pneg %p33
    %p40 = scmp.eq.s32.totalorder %s12, 5
    %p41 = por %p39, %p40
    %p42 = scmp.ne.s32.totalorder %s34, %s37
    %p43 = scmp.eq.s32.totalorder %s12, 0
    %p44 = por %p42, %p43
    %p45 = scmp.ne.s32.totalorder %s34, %s37
    %p46 = scmp.eq.s32.totalorder %s17, 5
    %p47 = por %p45, %p46
    %p48 = scmp.ne.s32.totalorder %s37, %s38
    %p49 = scmp.eq.s32.totalorder %s17, 0
    %p50 = por %p48, %p49
    %p51 = scmp.ne.s32.totalorder %s37, %s38
    %p52 = scmp.eq.s32.totalorder %s18, 5
    %p53 = por %p51, %p52
    %p55 = scmp.ne.s32.totalorder %s38, %s54
    %p56 = scmp.eq.s32.totalorder %s18, 0
    %p57 = por %p55, %p56
    %s58 = ssub.s32 %s20, %s27
    %p59 = scmp.eq.s32.totalorder %s58, 0
    %s61 = sadd.s32 %s60, 1
    %s62 = scalar_select %p59, %s60, %s61
    %p65 = pneg %p59
    %p66 = scmp.eq.s32.totalorder %s12, 5
    %p67 = por %p65, %p66
    %p68 = scmp.ne.s32.totalorder %s60, %s63
    %p69 = scmp.eq.s32.totalorder %s12, 0
    %p70 = por %p68, %p69
    %p71 = scmp.ne.s32.totalorder %s60, %s63
    %p72 = scmp.eq.s32.totalorder %s17, 5
    %p73 = por %p71, %p72
    %p74 = scmp.ne.s32.totalorder %s63, %s64
    %p75 = scmp.eq.s32.totalorder %s17, 0
    %p76 = por %p74, %p75
    %p77 = scmp.ne.s32.totalorder %s63, %s64
    %p78 = scmp.eq.s32.totalorder %s18, 5
    %p79 = por %p77, %p78
    %p81 = scmp.ne.s32.totalorder %s64, %s80
    %p82 = scmp.eq.s32.totalorder %s18, 0
    %p83 = por %p81, %p82
    %s85 = sadd.s32 %s84, 1
    %p88 = scmp.eq.s32.totalorder %s12, 5
    %p89 = scmp.ne.s32.totalorder %s84, %s86
    %p90 = scmp.eq.s32.totalorder %s12, 0
    %p91 = por %p89, %p90
    %p92 = scmp.ne.s32.totalorder %s84, %s86
    %p93 = scmp.eq.s32.totalorder %s17, 5
    %p94 = por %p92, %p93
    %p95 = scmp.ne.s32.totalorder %s86, %s87
    %p96 = scmp.eq.s32.totalorder %s17, 0
    %p97 = por %p95, %p96
    %p98 = scmp.ne.s32.totalorder %s86, %s87
    %p99 = scmp.eq.s32.totalorder %s18, 5
    %p100 = por %p98, %p99
    %p102 = scmp.ne.s32.totalorder %s87, %s101
    %p103 = scmp.eq.s32.totalorder %s18, 0
    %p104 = por %p102, %p103
    %s106 = sadd.s32 %s105, 1
    %p109 = scmp.eq.s32.totalorder %s12, 5
    %p110 = scmp.ne.s32.totalorder %s105, %s107
    %p111 = scmp.eq.s32.totalorder %s12, 0
    %p112 = por %p110, %p111
    %p113 = scmp.ne.s32.totalorder %s105, %s107
    %p114 = scmp.eq.s32.totalorder %s17, 5
    %p115 = por %p113, %p114
    %p116 = scmp.ne.s32.totalorder %s107, %s108
    %p117 = scmp.eq.s32.totalorder %s17, 0
    %p118 = por %p116, %p117
    %p119 = scmp.ne.s32.totalorder %s107, %s108
    %p120 = scmp.eq.s32.totalorder %s18, 5
    %p121 = por %p119, %p120
    %p123 = scmp.ne.s32.totalorder %s108, %s122
    %p124 = scmp.eq.s32.totalorder %s18, 0
    %p125 = por %p123, %p124
    %s127 = sadd.s32 %s126, 1
    %p130 = scmp.eq.s32.totalorder %s12, 5
    %p131 = scmp.ne.s32.totalorder %s126, %s128
    %p132 = scmp.eq.s32.totalorder %s12, 0
    %p133 = por %p131, %p132
    %p134 = scmp.ne.s32.totalorder %s126, %s128
    %p135 = scmp.eq.s32.totalorder %s17, 5
    %p136 = por %p134, %p135
    %p137 = scmp.ne.s32.totalorder %s128, %s129
    %p138 = scmp.eq.s32.totalorder %s17, 0
    %p139 = por %p137, %p138
    %p140 = scmp.ne.s32.totalorder %s128, %s129
    %p141 = scmp.eq.s32.totalorder %s18, 5
    %p142 = por %p140, %p141
    %p144 = scmp.ne.s32.totalorder %s129, %s143
    %p145 = scmp.eq.s32.totalorder %s18, 0
    %p146 = por %p144, %p145
    %s148 = sadd.s32 %s147, 1
    %p151 = scmp.eq.s32.totalorder %s12, 5
    %p152 = scmp.ne.s32.totalorder %s147, %s149
    %p153 = scmp.eq.s32.totalorder %s12, 0
    %p154 = por %p152, %p153
    %p155 = scmp.ne.s32.totalorder %s147, %s149
    %p156 = scmp.eq.s32.totalorder %s17, 5
    %p157 = por %p155, %p156
    %p158 = scmp.ne.s32.totalorder %s149, %s150
    %p159 = scmp.eq.s32.totalorder %s17, 0
    %p160 = por %p158, %p159
    %p161 = scmp.ne.s32.totalorder %s149, %s150
    %p162 = scmp.eq.s32.totalorder %s18, 5
    %p163 = por %p161, %p162
    %p165 = scmp.ne.s32.totalorder %s150, %s164
    %p166 = scmp.eq.s32.totalorder %s18, 0
    %p167 = por %p165, %p166
    %s168 = ssub.s32 %s20, %s27
    %p169 = scmp.eq.s32.totalorder %s168, 0
    %s171 = sadd.s32 %s170, 1
    %s172 = scalar_select %p169, %s170, %s171
    %p175 = pneg %p169
    %p176 = scmp.eq.s32.totalorder %s12, 5
    %p177 = por %p175, %p176
    %p178 = scmp.ne.s32.totalorder %s170, %s173
    %p179 = scmp.eq.s32.totalorder %s12, 0
    %p180 = por %p178, %p179
    %p181 = scmp.ne.s32.totalorder %s170, %s173
    %p182 = scmp.eq.s32.totalorder %s17, 5
    %p183 = por %p181, %p182
    %p184 = scmp.ne.s32.totalorder %s173, %s174
    %p185 = scmp.eq.s32.totalorder %s17, 0
    %p186 = por %p184, %p185
    %p187 = scmp.ne.s32.totalorder %s173, %s174
    %p188 = scmp.eq.s32.totalorder %s18, 5
    %p189 = por %p187, %p188
    %p191 = scmp.ne.s32.totalorder %s174, %s190
    %p192 = scmp.eq.s32.totalorder %s18, 0
    %p193 = por %p191, %p192
    %p194 = scmp.le.s32.totalorder 1, %s12
    %p195 = scmp.lt.s32.totalorder %s12, 7
    %p196 = pnand %p194, %p195
    %p197 = pneg %p196
    // Predicated region
    $region9: #{gmm_forward.1} parent=5 // pred_check
      _
    $region10: #{gmm_forward.1} parent=5 // pred_check_branch
      %199 = sbr.rel (%p196) target = $region12
    $region11: #{gmm_forward.1} parent=5 // pred_region
      %s200 = ssub.s32 %s12, 1
      // Predicated region
      $region13: #{gmm_forward.1} parent=11 // pred_check
        %p201 = pneg %p97
      $region14: #{gmm_forward.1} parent=11 // pred_check_branch
        %203 = sbr.rel (%p201) target = $region16
      $region15: #{gmm_forward.1} parent=11 // pred_region
        _
      $region16: #{gmm_forward.1} parent=11 // pred_fallthru
        _
      // Predicated region
      $region17: #{gmm_forward.1} parent=11 // pred_check
        %p204 = pneg %p118
      $region18: #{gmm_forward.1} parent=11 // pred_check_branch
        %206 = sbr.rel (%p204) target = $region20
      $region19: #{gmm_forward.1} parent=11 // pred_region
        _
      $region20: #{gmm_forward.1} parent=11 // pred_fallthru
        _
      // Predicated region
      $region21: #{gmm_forward.1} parent=11 // pred_check
        %p207 = pneg %p139
      $region22: #{gmm_forward.1} parent=11 // pred_check_branch
        %209 = sbr.rel (%p207) target = $region24
      $region23: #{gmm_forward.1} parent=11 // pred_region
        _
      $region24: #{gmm_forward.1} parent=11 // pred_fallthru
        _
      // Predicated region
      $region25: #{gmm_forward.1} parent=11 // pred_check
        %p210 = pneg %p160
      $region26: #{gmm_forward.1} parent=11 // pred_check_branch
        %212 = sbr.rel (%p210) target = $region28
      $region27: #{gmm_forward.1} parent=11 // pred_region
        _
      $region28: #{gmm_forward.1} parent=11 // pred_fallthru
        _
    $region12: #{gmm_forward.1} parent=5 // pred_fallthru
      _
    %p213 = scmp.lt.s32.totalorder %s12, 6
    // Predicated region
    $region29: #{gmm_forward.1} parent=5 // pred_check
      %p214 = pneg %p213
    $region30: #{gmm_forward.1} parent=5 // pred_check_branch
      %216 = sbr.rel (%p214) target = $region32
    $region31: #{gmm_forward.1} parent=5 // pred_region
      // Predicated region
      $region33: #{gmm_forward.1} parent=31 // pred_check
        %p217 = pneg %p44
      $region34: #{gmm_forward.1} parent=31 // pred_check_branch
        %219 = sbr.rel (%p217) target = $region36
      $region35: #{gmm_forward.1} parent=31 // pred_region
        %s220 = smul.u32 2, %s20
        %p221 = scmp.lt.s32.totalorder %s220, 3
        %s222 = scalar_select %p221, %s220, 3
        %s223 = smul.addr %s222, 4
        %s224 = scalar_lea.vmem %s0, %s223
        %s225 = smul.u32 2, %s20
      $region36: #{gmm_forward.1} parent=31 // pred_fallthru
        _
      // Predicated region
      $region37: #{gmm_forward.1} parent=31 // pred_check
        %p226 = pneg %p70
      $region38: #{gmm_forward.1} parent=31 // pred_check_branch
        %228 = sbr.rel (%p226) target = $region40
      $region39: #{gmm_forward.1} parent=31 // pred_region
        %s229 = smul.u32 2, %s20
        %p230 = scmp.lt.s32.totalorder %s229, 3
        %s231 = scalar_select %p230, %s229, 3
        %s232 = smul.addr %s231, 8
        %s233 = scalar_lea.vmem %s1, %s232
        %s234 = smul.u32 2, %s20
      $region40: #{gmm_forward.1} parent=31 // pred_fallthru
        _
    $region32: #{gmm_forward.1} parent=5 // pred_fallthru
      _
    %p235 = scmp.le.s32.totalorder 1, %s12
    %p236 = scmp.lt.s32.totalorder %s12, 7
    %p237 = pnand %p235, %p236
    %p238 = pneg %p237
    // Predicated region
    $region41: #{gmm_forward.1} parent=5 // pred_check
      _
    $region42: #{gmm_forward.1} parent=5 // pred_check_branch
      %240 = sbr.rel (%p237) target = $region44
    $region43: #{gmm_forward.1} parent=5 // pred_region
      %s241 = ssub.s32 %s12, 1
      %s242 = smul.u32 2, %s22
      %p243 = scmp.lt.s32.totalorder %s242, 3
      %s244 = scalar_select %p243, %s242, 3
      %s245 = smul.addr %s244, 4
      %s246 = scalar_lea.vmem %s0, %s245
      %p247 = pneg %p50
      %p248 = pneg %p47
      %s249 = smul.u32 2, %s22
      %p250 = scmp.lt.s32.totalorder %s249, 3
      %s251 = scalar_select %p250, %s249, 3
      %s252 = smul.addr %s251, 8
      %s253 = scalar_lea.vmem %s1, %s252
      %p254 = pneg %p76
      %p255 = pneg %p73
      %p256 = pneg %p97
      %p257 = pneg %p94
      %p258 = pneg %p118
      %p259 = pneg %p115
      %p260 = pneg %p139
      %p261 = pneg %p136
      %p262 = pneg %p160
      %p263 = pneg %p157
      %p264 = pneg %p186
      %p265 = pneg %p183
      %s266 = smul.u32 2, %s22
      %p267 = scmp.lt.s32.totalorder %s266, 3
      %s268 = scalar_select %p267, %s266, 3
      %s269 = smul.addr %s268, 8
      %s270 = scalar_lea.vmem %s6, %s269
      %s271 = smul.u32 2, %s22
      %p272 = scmp.lt.s32.totalorder %s271, 3
      %s273 = scalar_select %p272, %s271, 3
      %s274 = smul.addr %s273, 4
      %s275 = scalar_lea.vmem %s0, %s274
      %s276 = smul.u32 2, %s22
      %s277 = smul.u32 2, %s22
      %p278 = scmp.lt.s32.totalorder %s277, 3
      %s279 = scalar_select %p278, %s277, 3
      %s280 = smul.addr %s279, 8
      %s281 = scalar_lea.vmem %s1, %s280
      %s282 = smul.u32 2, %s22
      %s283 = smul.u32 2, %s22
      %p284 = scmp.lt.s32.totalorder %s283, 3
      %s285 = scalar_select %p284, %s283, 3
      %s286 = smul.addr %s285, 8
      %s287 = scalar_lea.vmem %s6, %s286
      %s288 = smul.u32 2, %s22
      %p290 = scmp.eq.s32.totalorder %s21, 0
      %p291 = scmp.eq.s32.totalorder %s22, 0
      %p292 = pnand %p290, %p291
      %p293 = pneg %p292
      // Predicated region
      $region45: #{gmm_forward.1} parent=43 // pred_check
        _
      $region46: #{gmm_forward.1} parent=43 // pred_check_branch
        %295 = sbr.rel (%p292) target = $region48
      $region47: #{gmm_forward.1} parent=43 // pred_region
        %296 = vst [vmem:[#allocation2] sm:$0xff] 0.0
      $region48: #{gmm_forward.1} parent=43 // pred_fallthru
        _
      %v297 = vld [vmem:[%s5] sm:$0xff]
      %v298 = vld [vmem:[%s275] sm:$0xf]
      %v299 = vld [vmem:[%s275 + $0x4] sm:$0xf]
      %v300 = vld [vmem:[%s2] sm:$0xf]
      %v301 = vld [vmem:[%s2 + $0x4] sm:$0xf]
      %v302 = vld [vmem:[%s2 + $0x8] sm:$0xf]
      %v303 = vld [vmem:[%s2 + $0xc] sm:$0xf]
      %v304 = vlaneseq
      %v305 = vshrl.u32 %v304, 7
      %v306 = vsub.s32 0, %v305
      %v307 = vrot.slane %v297, %v306
      %v310 = vunpack.c.l.b16 %v298
      %v311 = vunpack.c.l.b16 %v299
      %v312 = vpack.c.b16 %v311, %v310
      %v317 = vunpack.c.l.b16 %v300
      %v318 = vunpack.c.l.b16 %v301
      %v319 = vunpack.c.l.b16 %v302
      %v320 = vunpack.c.l.b16 %v303
      %v321 = vpack.c.b16 %v318, %v317
      %v322 = vpack.c.b16 %v320, %v319
      %vm325 = vcmask 261120
      %v327 = vsel %vm325, %v312, 0
      %329 = vmatprep.subr.bf16.mxu0 0
      %330 = vmatpush1.bf16.msra.mxu0 %v321
      %331 = vmatprep.subr.bf16.mxu0 0
      %332 = vmatpush1.bf16.msra.mxu0 %v322
      %333 = vmatprep.subr.bf16.mxu0 0
      %334 = vmatpush1.bf16.msra.mxu0 0
      %335 = vmatprep.subr.bf16.mxu0 0
      %336 = vmatpush1.bf16.msra.mxu0 0
      %337 = vmatprep.subr.bf16.mxu0 0
      %338 = vmatpush1.bf16.msra.mxu0 0
      %339 = vmatprep.subr.bf16.mxu0 0
      %340 = vmatpush1.bf16.msra.mxu0 0
      %341 = vmatprep.subr.bf16.mxu0 0
      %342 = vmatpush1.bf16.msra.mxu0 0
      %343 = vmatprep.subr.bf16.mxu0 0
      %344 = vmatpush1.bf16.msra.mxu0 0
      %345 = vmatprep.subr.bf16.mxu0 0
      %346 = vmatpush1.bf16.msra.mxu0 0
      %347 = vmatprep.subr.bf16.mxu0 0
      %348 = vmatpush1.bf16.msra.mxu0 0
      %349 = vmatprep.subr.bf16.mxu0 0
      %350 = vmatpush1.bf16.msra.mxu0 0
      %351 = vmatprep.subr.bf16.mxu0 0
      %352 = vmatpush1.bf16.msra.mxu0 0
      %353 = vmatprep.subr.bf16.mxu0 0
      %354 = vmatpush1.bf16.msra.mxu0 0
      %355 = vmatprep.subr.bf16.mxu0 0
      %356 = vmatpush1.bf16.msra.mxu0 0
      %357 = vmatprep.subr.bf16.mxu0 0
      %358 = vmatpush1.bf16.msra.mxu0 0
      %359 = vmatprep.subr.bf16.mxu0 0
      %360 = vmatpush1.bf16.msra.mxu0 0
      %361 = vmatprep.mubr.bf16.mxu0 0
      %362 = vmatmul.mubr.bf16.gmra.mrb[0].mxu0 %v327
      %v363 = vpop.f32.mrb[0].mxu0
      %v364 = vadd.f32 %v307, %v363
      %v365 = vpop.f32.mrb[0].mxu0
      %v366 = vpop.f32.mrb[0].mxu0
      %v367 = vadd.f32 %v307, %v366
      %v368 = vpop.f32.mrb[0].mxu0
      %369 = vdwg.mxu0
      // Predicated region
      $region49: #{gmm_forward.1} parent=43 // pred_check
        %p370 = pneg %p290
      $region50: #{gmm_forward.1} parent=43 // pred_check_branch
        %372 = sbr.rel (%p370) target = $region52
      $region51: #{gmm_forward.1} parent=43 // pred_region
        %v373 = vlaneseq
        %v374 = vshrl.u32 %v373, 7
        %v375 = vadd.s32 %v374, 8
        %s376 = smul.u32 %s22, 16
        %v377 = vstv %s376
        %v378 = vadd.s32 %v374, %v377
        %v379 = vadd.s32 %v375, %v377
        %vm380 = vcmp.lt.s32.totalorder %v378, 24
        %vm381 = vcmp.lt.s32.totalorder %v379, 24
        %v382 = vsel %vm380, 1, 0
        %v383 = vsel %vm381, 1, 0
        %v384 = vcvt.s32.f32 %v382
        %v385 = vcvt.s32.f32 %v383
        %s386 = ssub.s32 24, %s376
        %p387 = scmp.lt.s32.totalorder %s386, 16
        %s388 = scalar_select %p387, %s386, 16
        %s389 = scvt.s32.f32 %s388
        %s390 = scvt.s32.f32 %s376
        %s391 = sadd.f32 %s390, %s389
        %v392 = vmul.f32 %v364, %v384
        %v393 = vmul.f32 %v367, %v385
        %v394 = vsel %vm325, %v392, 0.0
        %v395 = vsel %vm325, %v393, 0.0
        %v396 = vadd.f32 %v394, %v395
        %v397 = vrot.slane %v396, 4
        %v398 = vadd.f32 %v396, %v397
        %v399 = vrot.slane %v398, 2
        %v400 = vadd.f32 %v398, %v399
        %v401 = vrot.slane %v400, 1
        %v402 = vadd.f32 %v400, %v401
        %v403 = vstv %s389
        %v404 = vrcp.pop %v403
        %v405 = vmul.f32 %v402, %v404
        %v406 = vsub.f32 %v364, %v405
        %v407 = vsub.f32 %v367, %v405
        %v408 = vmul.f32 %v406, %v384
        %v409 = vmul.f32 %v407, %v385
        %v410 = vmul.f32 %v408, %v408
        %v411 = vmul.f32 %v409, %v409
        %v412 = vsel %vm325, %v410, 0.0
        %v413 = vsel %vm325, %v411, 0.0
        %v414 = vadd.f32 %v412, %v413
        %v415 = vrot.slane %v414, 4
        %v416 = vadd.f32 %v414, %v415
        %v417 = vrot.slane %v416, 2
        %v418 = vadd.f32 %v416, %v417
        %v419 = vrot.slane %v418, 1
        %v420 = vadd.f32 %v418, %v419
        %v421 = vld [vmem:[#allocation2] sm:$0x1]
        %v422 = vld [vmem:[#allocation2 + $0x1] sm:$0x1]
        %v423 = vsub.f32 %v405, %v421
        %v424 = vstv %s391
        %v425 = vrcp.pop %v424
        %s426 = vtos %v425
        %s427 = smul.f32 %s389, %s426
        %v428 = vstv %s427
        %v429 = vmul.f32 %v423, %v428
        %v430 = vadd.f32 %v421, %v429
        %vm431 = vcmask 253952
        %432 = vst.msk [vmem:[#allocation2] sm:$0x1] %vm431, %v430
        %v433 = vadd.f32 %v422, %v420
        %v434 = vmul.f32 %v423, %v423
        %s435 = smul.f32 %s390, %s389
        %v436 = vstv %s391
        %v437 = vrcp.pop %v436
        %s438 = vtos %v437
        %s439 = smul.f32 %s435, %s438
        %v440 = vstv %s439
        %v441 = vmul.f32 %v434, %v440
        %v442 = vadd.f32 %v433, %v441
        %443 = vst.msk [vmem:[#allocation2 + $0x1] sm:$0x1] %vm431, %v442
      $region52: #{gmm_forward.1} parent=43 // pred_fallthru
        _
      %p444 = scmp.ge.s32.totalorder %s21, 1
      // Predicated region
      $region53: #{gmm_forward.1} parent=43 // pred_check
        %p445 = pneg %p444
      $region54: #{gmm_forward.1} parent=43 // pred_check_branch
        %447 = sbr.rel (%p445) target = $region56
      $region55: #{gmm_forward.1} parent=43 // pred_region
        %v448 = vld [vmem:[#allocation2] sm:$0x1]
        %v449 = vld [vmem:[#allocation2 + $0x1] sm:$0x1]
        %v450 = vmul.f32 %v449, 0.041666668
        %v451 = vadd.f32 %v450, 1e-05
        %v452 = vrsqrt.pop %v451
        %v453 = vlaneseq
        %v454 = vshrl.u32 %v453, 7
        %v455 = vsub.s32 0, %v454
        %v456 = vrot.slane %v448, %v455
        %v457 = vsub.f32 %v364, %v456
        %v458 = vsub.f32 %v367, %v456
        %v459 = vlaneseq
        %v460 = vshrl.u32 %v459, 7
        %v461 = vsub.s32 0, %v460
        %v462 = vrot.slane %v452, %v461
        %v463 = vmul.f32 %v457, %v462
        %v464 = vmul.f32 %v458, %v462
        %v465 = vlaneseq
        %v466 = vshrl.u32 %v465, 7
        %v467 = vsub.s32 1, %v466
        %v468 = vrot.slane %v297, %v467
        %v469 = vmul.f32 %v463, %v468
        %v470 = vmul.f32 %v464, %v468
        %v471 = vlaneseq
        %v472 = vshrl.u32 %v471, 7
        %v473 = vsub.s32 2, %v472
        %v474 = vrot.slane %v297, %v473
        %v475 = vadd.f32 %v469, %v474
        %v476 = vadd.f32 %v470, %v474
        %v477 = vmax.f32 %v475, 0.0
        %v478 = vmax.f32 %v476, 0.0
        %v479 = vpack.c.bf16 %v478, %v477
        %v480 = vld [vmem:[%s3] sm:$0xf]
        %v481 = vld [vmem:[%s3 + $0x4] sm:$0xf]
        %v482 = vld [vmem:[%s3 + $0x8] sm:$0xf]
        %v483 = vld [vmem:[%s3 + $0xc] sm:$0xf]
        %v484 = vlaneseq
        %v485 = vshrl.u32 %v484, 7
        %v486 = vsub.s32 3, %v485
        %v487 = vrot.slane %v297, %v486
        %v492 = vunpack.c.l.b16 %v480
        %v493 = vunpack.c.l.b16 %v481
        %v494 = vunpack.c.l.b16 %v482
        %v495 = vunpack.c.l.b16 %v483
        %v496 = vpack.c.b16 %v493, %v492
        %v497 = vpack.c.b16 %v495, %v494
        %v501 = vsel %vm325, %v479, 0
        %503 = vmatprep.subr.bf16.mxu0 0
        %504 = vmatpush1.bf16.msra.mxu0 %v496
        %505 = vmatprep.subr.bf16.mxu0 0
        %506 = vmatpush1.bf16.msra.mxu0 %v497
        %507 = vmatprep.subr.bf16.mxu0 0
        %508 = vmatpush1.bf16.msra.mxu0 0
        %509 = vmatprep.subr.bf16.mxu0 0
        %510 = vmatpush1.bf16.msra.mxu0 0
        %511 = vmatprep.subr.bf16.mxu0 0
        %512 = vmatpush1.bf16.msra.mxu0 0
        %513 = vmatprep.subr.bf16.mxu0 0
        %514 = vmatpush1.bf16.msra.mxu0 0
        %515 = vmatprep.subr.bf16.mxu0 0
        %516 = vmatpush1.bf16.msra.mxu0 0
        %517 = vmatprep.subr.bf16.mxu0 0
        %518 = vmatpush1.bf16.msra.mxu0 0
        %519 = vmatprep.subr.bf16.mxu0 0
        %520 = vmatpush1.bf16.msra.mxu0 0
        %521 = vmatprep.subr.bf16.mxu0 0
        %522 = vmatpush1.bf16.msra.mxu0 0
        %523 = vmatprep.subr.bf16.mxu0 0
        %524 = vmatpush1.bf16.msra.mxu0 0
        %525 = vmatprep.subr.bf16.mxu0 0
        %526 = vmatpush1.bf16.msra.mxu0 0
        %527 = vmatprep.subr.bf16.mxu0 0
        %528 = vmatpush1.bf16.msra.mxu0 0
        %529 = vmatprep.subr.bf16.mxu0 0
        %530 = vmatpush1.bf16.msra.mxu0 0
        %531 = vmatprep.subr.bf16.mxu0 0
        %532 = vmatpush1.bf16.msra.mxu0 0
        %533 = vmatprep.subr.bf16.mxu0 0
        %534 = vmatpush1.bf16.msra.mxu0 0
        %535 = vmatprep.mubr.bf16.mxu0 0
        %536 = vmatmul.mubr.bf16.gmra.mrb[0].mxu0 %v501
        %v537 = vpop.f32.mrb[0].mxu0
        %v538 = vadd.f32 %v487, %v537
        %v539 = vpop.f32.mrb[0].mxu0
        %v540 = vpop.f32.mrb[0].mxu0
        %v541 = vadd.f32 %v487, %v540
        %v542 = vpop.f32.mrb[0].mxu0
        %543 = vdwg.mxu0
        %p544 = scmp.eq.s32.totalorder %s21, 1
        // Predicated region
        $region57: #{gmm_forward.1} parent=55 // pred_check
          %p545 = pneg %p544
        $region58: #{gmm_forward.1} parent=55 // pred_check_branch
          %547 = sbr.rel (%p545) target = $region60
        $region59: #{gmm_forward.1} parent=55 // pred_region
          %v548 = vlaneseq
          %v549 = vshrl.u32 %v548, 7
          %v550 = vadd.s32 %v549, 8
          %s551 = smul.u32 %s22, 16
          %v552 = vstv %s551
          %v553 = vadd.s32 %v549, %v552
          %v554 = vadd.s32 %v550, %v552
          %vm555 = vcmp.lt.s32.totalorder %v553, 24
          %vm556 = vcmp.lt.s32.totalorder %v554, 24
          %v557 = vsel %vm555, 1, 0
          %v558 = vsel %vm556, 1, 0
          %v559 = vcvt.s32.f32 %v557
          %v560 = vcvt.s32.f32 %v558
          %s561 = ssub.s32 24, %s551
          %p562 = scmp.lt.s32.totalorder %s561, 16
          %s563 = scalar_select %p562, %s561, 16
          %s564 = scvt.s32.f32 %s563
          %s565 = scvt.s32.f32 %s551
          %s566 = sadd.f32 %s565, %s564
          %v567 = vmul.f32 %v538, %v559
          %v568 = vmul.f32 %v541, %v560
          %v569 = vsel %vm325, %v567, 0.0
          %v570 = vsel %vm325, %v568, 0.0
          %v571 = vadd.f32 %v569, %v570
          %v572 = vrot.slane %v571, 4
          %v573 = vadd.f32 %v571, %v572
          %v574 = vrot.slane %v573, 2
          %v575 = vadd.f32 %v573, %v574
          %v576 = vrot.slane %v575, 1
          %v577 = vadd.f32 %v575, %v576
          %v578 = vstv %s564
          %v579 = vrcp.pop %v578
          %v580 = vmul.f32 %v577, %v579
          %v581 = vsub.f32 %v538, %v580
          %v582 = vsub.f32 %v541, %v580
          %v583 = vmul.f32 %v581, %v559
          %v584 = vmul.f32 %v582, %v560
          %v585 = vmul.f32 %v583, %v583
          %v586 = vmul.f32 %v584, %v584
          %v587 = vsel %vm325, %v585, 0.0
          %v588 = vsel %vm325, %v586, 0.0
          %v589 = vadd.f32 %v587, %v588
          %v590 = vrot.slane %v589, 4
          %v591 = vadd.f32 %v589, %v590
          %v592 = vrot.slane %v591, 2
          %v593 = vadd.f32 %v591, %v592
          %v594 = vrot.slane %v593, 1
          %v595 = vadd.f32 %v593, %v594
          %v596 = vld [vmem:[#allocation2 + $0x2] sm:$0x1]
          %v597 = vld [vmem:[#allocation2 + $0x3] sm:$0x1]
          %v598 = vsub.f32 %v580, %v596
          %v599 = vstv %s566
          %v600 = vrcp.pop %v599
          %s601 = vtos %v600
          %s602 = smul.f32 %s564, %s601
          %v603 = vstv %s602
          %v604 = vmul.f32 %v598, %v603
          %v605 = vadd.f32 %v596, %v604
          %vm606 = vcmask 253952
          %607 = vst.msk [vmem:[#allocation2 + $0x2] sm:$0x1] %vm606, %v605
          %v608 = vadd.f32 %v597, %v595
          %v609 = vmul.f32 %v598, %v598
          %s610 = smul.f32 %s565, %s564
          %v611 = vstv %s566
          %v612 = vrcp.pop %v611
          %s613 = vtos %v612
          %s614 = smul.f32 %s610, %s613
          %v615 = vstv %s614
          %v616 = vmul.f32 %v609, %v615
          %v617 = vadd.f32 %v608, %v616
          %618 = vst.msk [vmem:[#allocation2 + $0x3] sm:$0x1] %vm606, %v617
        $region60: #{gmm_forward.1} parent=55 // pred_fallthru
          _
        %p619 = scmp.eq.s32.totalorder %s21, 2
        // Predicated region
        $region61: #{gmm_forward.1} parent=55 // pred_check
          %p620 = pneg %p619
        $region62: #{gmm_forward.1} parent=55 // pred_check_branch
          %622 = sbr.rel (%p620) target = $region64
        $region63: #{gmm_forward.1} parent=55 // pred_region
          %v623 = vld [vmem:[#allocation2 + $0x2] sm:$0x1]
          %v624 = vld [vmem:[#allocation2 + $0x3] sm:$0x1]
          %v625 = vmul.f32 %v624, 0.041666668
          %v626 = vadd.f32 %v625, 1e-05
          %v627 = vrsqrt.pop %v626
          %v628 = vlaneseq
          %v629 = vshrl.u32 %v628, 7
          %v630 = vsub.s32 0, %v629
          %v631 = vrot.slane %v623, %v630
          %v632 = vsub.f32 %v538, %v631
          %v633 = vsub.f32 %v541, %v631
          %v634 = vlaneseq
          %v635 = vshrl.u32 %v634, 7
          %v636 = vsub.s32 0, %v635
          %v637 = vrot.slane %v627, %v636
          %v638 = vmul.f32 %v632, %v637
          %v639 = vmul.f32 %v633, %v637
          %v640 = vlaneseq
          %v641 = vshrl.u32 %v640, 7
          %v642 = vsub.s32 4, %v641
          %v643 = vrot.slane %v297, %v642
          %v644 = vmul.f32 %v638, %v643
          %v645 = vmul.f32 %v639, %v643
          %v646 = vlaneseq
          %v647 = vshrl.u32 %v646, 7
          %v648 = vsub.s32 5, %v647
          %v649 = vrot.slane %v297, %v648
          %v650 = vadd.f32 %v644, %v649
          %v651 = vadd.f32 %v645, %v649
          %v652 = vmax.f32 %v650, 0.0
          %v653 = vmax.f32 %v651, 0.0
          %v654 = vpack.c.bf16 %v653, %v652
          %v655 = vld [vmem:[%s4] sm:$0xf]
          %v656 = vld [vmem:[%s4 + $0x4] sm:$0xf]
          %v657 = vld [vmem:[%s4 + $0x8] sm:$0xf]
          %v658 = vld [vmem:[%s4 + $0xc] sm:$0xf]
          %v659 = vlaneseq
          %v660 = vshrl.u32 %v659, 7
          %v661 = vsub.s32 6, %v660
          %v662 = vrot.slane %v297, %v661
          %v667 = vunpack.c.l.b16 %v655
          %v668 = vunpack.c.l.b16 %v656
          %v669 = vunpack.c.l.b16 %v657
          %v670 = vunpack.c.l.b16 %v658
          %v671 = vpack.c.b16 %v668, %v667
          %v672 = vpack.c.b16 %v670, %v669
          %v676 = vsel %vm325, %v654, 0
          %678 = vmatprep.subr.bf16.mxu0 0
          %679 = vmatpush1.bf16.msra.mxu0 %v671
          %680 = vmatprep.subr.bf16.mxu0 0
          %681 = vmatpush1.bf16.msra.mxu0 %v672
          %682 = vmatprep.subr.bf16.mxu0 0
          %683 = vmatpush1.bf16.msra.mxu0 0
          %684 = vmatprep.subr.bf16.mxu0 0
          %685 = vmatpush1.bf16.msra.mxu0 0
          %686 = vmatprep.subr.bf16.mxu0 0
          %687 = vmatpush1.bf16.msra.mxu0 0
          %688 = vmatprep.subr.bf16.mxu0 0
          %689 = vmatpush1.bf16.msra.mxu0 0
          %690 = vmatprep.subr.bf16.mxu0 0
          %691 = vmatpush1.bf16.msra.mxu0 0
          %692 = vmatprep.subr.bf16.mxu0 0
          %693 = vmatpush1.bf16.msra.mxu0 0
          %694 = vmatprep.subr.bf16.mxu0 0
          %695 = vmatpush1.bf16.msra.mxu0 0
          %696 = vmatprep.subr.bf16.mxu0 0
          %697 = vmatpush1.bf16.msra.mxu0 0
          %698 = vmatprep.subr.bf16.mxu0 0
          %699 = vmatpush1.bf16.msra.mxu0 0
          %700 = vmatprep.subr.bf16.mxu0 0
          %701 = vmatpush1.bf16.msra.mxu0 0
          %702 = vmatprep.subr.bf16.mxu0 0
          %703 = vmatpush1.bf16.msra.mxu0 0
          %704 = vmatprep.subr.bf16.mxu0 0
          %705 = vmatpush1.bf16.msra.mxu0 0
          %706 = vmatprep.subr.bf16.mxu0 0
          %707 = vmatpush1.bf16.msra.mxu0 0
          %708 = vmatprep.subr.bf16.mxu0 0
          %709 = vmatpush1.bf16.msra.mxu0 0
          %710 = vmatprep.mubr.bf16.mxu0 0
          %711 = vmatmul.mubr.bf16.gmra.mrb[0].mxu0 %v676
          %v712 = vpop.f32.mrb[0].mxu0
          %v713 = vadd.f32 %v662, %v712
          %v714 = vpop.f32.mrb[0].mxu0
          %v715 = vpop.f32.mrb[0].mxu0
          %v716 = vadd.f32 %v662, %v715
          %v717 = vpop.f32.mrb[0].mxu0
          %718 = vdwg.mxu0
          %v719 = vlaneseq
          %v720 = vand.u32 %v719, 127
          %vm721 = vcmp.gt.f32.partialorder %v713, 20.0
          %vm722 = vcmp.gt.f32.partialorder %v716, 20.0
          %v723 = vmin.f32 %v713, 20.0
          %v724 = vmin.f32 %v716, 20.0
          %v725 = vmul.f32 %v723, 1.442695
          %v726 = vpow.pop %v725
          %v727 = vmul.f32 %v724, 1.442695
          %v728 = vpow.pop %v727
          %v729 = vadd.f32 %v726, 1.0
          %v730 = vlog2.pop %v729
          %v731 = vmul.f32 %v730, 0.6931472
          %v732 = vmul.f32 -0.5, %v726
          %v733 = vadd.f32 %v732, 1.0
          %v734 = vmul.f32 %v733, %v726
          %v735 = vand.u32 2147483647, %v726
          %vm736 = vcmp.lt.f32.partialorder %v735, 0.0004427343
          %v737 = vsel %vm736, %v734, %v731
          %v738 = vadd.f32 %v728, 1.0
          %v739 = vlog2.pop %v738
          %v740 = vmul.f32 %v739, 0.6931472
          %v741 = vmul.f32 -0.5, %v728
          %v742 = vadd.f32 %v741, 1.0
          %v743 = vmul.f32 %v742, %v728
          %v744 = vand.u32 2147483647, %v728
          %vm745 = vcmp.lt.f32.partialorder %v744, 0.0004427343
          %v746 = vsel %vm745, %v743, %v740
          %v747 = vsel %vm721, %v713, %v737
          %v748 = vsel %vm722, %v716, %v746
          %vm749 = vcmp.ge.s32.totalorder %v720, 16
          %vm750 = vcmp.lt.s32.totalorder %v720, 24
          %vm751 = vmand %vm749, %vm750
          %v752 = vsel %vm751, %v713, -inf
          %v753 = vsel %vm751, %v716, -inf
          %754 = vmax.xlane.f32.xlu0 %v752
          %v755 = vpop.xlane.xlu0 %754
          %756 = vmax.xlane.f32.xlu0 %v753
          %v757 = vpop.xlane.xlu0 %756
          %v758 = vsub.f32 %v752, %v755
          %v759 = vsub.f32 %v753, %v757
          %v760 = vmul.f32 %v758, 1.442695
          %v761 = vpow.pop %v760
          %v762 = vmul.f32 %v759, 1.442695
          %v763 = vpow.pop %v762
          %764 = vadd.xlane.f32.xlu0 %v761
          %v765 = vpop.xlane.xlu0 %764
          %766 = vadd.xlane.f32.xlu0 %v763
          %v767 = vpop.xlane.xlu0 %766
          %v768 = vrcp.pop %v765
          %v769 = vmul.f32 %v761, %v768
          %v770 = vrcp.pop %v767
          %v771 = vmul.f32 %v763, %v770
          %v772 = vsub.f32 %v713, %v755
          %v773 = vsub.f32 %v716, %v757
          %v774 = vlog2.pop %v765
          %v775 = vmul.f32 %v774, 0.6931472
          %v776 = vlog2.pop %v767
          %v777 = vmul.f32 %v776, 0.6931472
          %v778 = vsub.f32 %v772, %v775
          %v779 = vsub.f32 %v773, %v777
          %v780 = vld [vmem:[%s281] sm:$0xff]
          %v781 = vld [vmem:[%s281 + $0x8] sm:$0xff]
          %v782 = vrcp.pop %v747
          %v783 = vrcp.pop %v748
          %785 = vset.pattern.permute.xlu0 0
          %786 = vperm.xlu0 %785, %v780
          %v787 = vpop.permute.xlu0 %786
          %790 = vset.pattern.permute.xlu0 0
          %791 = vperm.xlu0 %790, %v781
          %v792 = vpop.permute.xlu0 %791
          %v794 = vsub.f32 %v787, %v747
          %v795 = vsub.f32 %v792, %v748
          %798 = vrot.lane.b32.xlu0 %v782, 120
          %v799 = vpop.permute.xlu0 %798
          %800 = vrot.lane.b32.xlu0 %v783, 120
          %v801 = vpop.permute.xlu0 %800
          %v804 = vmul.f32 %v794, %v799
          %v805 = vmul.f32 %v795, %v801
          %v806 = vmul.f32 %v804, 0.5
          %v807 = vmul.f32 %v805, 0.5
          %v808 = vmul.f32 %v806, %v804
          %v809 = vmul.f32 %v807, %v805
          %812 = vrot.lane.b32.xlu0 %v808, 16
          %v813 = vpop.permute.xlu0 %812
          %814 = vrot.lane.b32.xlu0 %v809, 16
          %v815 = vpop.permute.xlu0 %814
          %v818 = vsub.f32 %v778, %v813
          %v819 = vsub.f32 %v779, %v815
          %v820 = vlog2.pop %v747
          %v821 = vmul.f32 %v820, 0.6931472
          %v822 = vlog2.pop %v748
          %v823 = vmul.f32 %v822, 0.6931472
          %826 = vrot.lane.b32.xlu0 %v821, 8
          %v827 = vpop.permute.xlu0 %826
          %828 = vrot.lane.b32.xlu0 %v823, 8
          %v829 = vpop.permute.xlu0 %828
          %v832 = vsub.f32 %v818, %v827
          %v833 = vsub.f32 %v819, %v829
          %v834 = vsub.f32 %v832, 0.9189385
          %v835 = vsub.f32 %v833, 0.9189385
          %vm836 = vcmask 195712
          %v837 = vsel %vm836, %v834, -inf
          %838 = vmax.xlane.f32.xlu0 %v837
          %v839 = vpop.xlane.xlu0 %838
          %v840 = vsel %vm836, %v835, -inf
          %841 = vmax.xlane.f32.xlu0 %v840
          %v842 = vpop.xlane.xlu0 %841
          %v843 = vsub.f32 %v834, %v839
          %v844 = vsub.f32 %v835, %v842
          %v845 = vmul.f32 %v843, 1.442695
          %v846 = vpow.pop %v845
          %v847 = vmul.f32 %v844, 1.442695
          %v848 = vpow.pop %v847
          %851 = vrot.lane.b32.xlu0 %v846, 112
          %v852 = vpop.permute.xlu0 %851
          %853 = vrot.lane.b32.xlu0 %v848, 112
          %v854 = vpop.permute.xlu0 %853
          %vm857 = vcmask 64512
          %v858 = vsel %vm857, %v852, 0.0
          %859 = vadd.xlane.f32.xlu0 %v858
          %v860 = vpop.xlane.xlu0 %859
          %v861 = vsel %vm857, %v854, 0.0
          %862 = vadd.xlane.f32.xlu0 %v861
          %v863 = vpop.xlane.xlu0 %862
          %v864 = vlog2.pop %v860
          %v865 = vmul.f32 %v864, 0.6931472
          %v866 = vlog2.pop %v863
          %v867 = vmul.f32 %v866, 0.6931472
          %v868 = vadd.f32 %v839, %v865
          %v869 = vadd.f32 %v842, %v867
          %vm870 = vcmp.lt.s32.totalorder %v720, 16
          %vm871 = vcmp.eq.s32.totalorder %v720, 24
          %v872 = vsel %vm871, %v868, 0.0
          %v873 = vsel %vm871, %v869, 0.0
          %v874 = vsel %vm751, %v769, %v872
          %v875 = vsel %vm751, %v771, %v873
          %v876 = vsel %vm870, %v747, %v874
          %v877 = vsel %vm870, %v748, %v875
          %878 = vst [vmem:[%s287] sm:$0xff] %v876
          %879 = vst [vmem:[%s287 + $0x8] sm:$0xff] %v877
        $region64: #{gmm_forward.1} parent=55 // pred_fallthru
          _
      $region56: #{gmm_forward.1} parent=43 // pred_fallthru
        _
      %s880 = smul.u32 2, %s22
      %p881 = scmp.lt.s32.totalorder %s880, 3
      %s882 = scalar_select %p881, %s880, 3
      %s883 = smul.addr %s882, 8
      %s884 = scalar_lea.vmem %s6, %s883
      // Predicated region
      $region65: #{gmm_forward.1} parent=43 // pred_check
        %p885 = pneg %p183
      $region66: #{gmm_forward.1} parent=43 // pred_check_branch
        %887 = sbr.rel (%p885) target = $region68
      $region67: #{gmm_forward.1} parent=43 // pred_region
        %s888 = smul.u32 2, %s22
      $region68: #{gmm_forward.1} parent=43 // pred_fallthru
        _
    $region44: #{gmm_forward.1} parent=5 // pred_fallthru
      _
    %p889 = scmp.le.s32.totalorder 2, %s12
    // Predicated region
    $region69: #{gmm_forward.1} parent=5 // pred_check
      %p890 = pneg %p889
    $region70: #{gmm_forward.1} parent=5 // pred_check_branch
      %892 = sbr.rel (%p890) target = $region72
    $region71: #{gmm_forward.1} parent=5 // pred_region
      %s893 = ssub.s32 %s12, 2
      // Predicated region
      $region73: #{gmm_forward.1} parent=71 // pred_check
        %p894 = pneg %p189
      $region74: #{gmm_forward.1} parent=71 // pred_check_branch
        %896 = sbr.rel (%p894) target = $region76
      $region75: #{gmm_forward.1} parent=71 // pred_region
        %s897 = smul.u32 2, %s24
        %p898 = scmp.lt.s32.totalorder %s897, 3
        %s899 = scalar_select %p898, %s897, 3
        %s900 = smul.addr %s899, 8
        %s901 = scalar_lea.vmem %s6, %s900
      $region76: #{gmm_forward.1} parent=71 // pred_fallthru
        _
    $region72: #{gmm_forward.1} parent=5 // pred_fallthru
      _
  $region6: #{gmm_forward.1} parent=0 // loop_footer
    %s16 = sadd.s32 1, %s12
  $region7: #{gmm_forward.1} parent=0 // loop_footer_branch
    %11 = sbr.rel target = $region3
  $region8: #{gmm_forward.1} parent=0 // loop_exit
    _

</llo_original>
